<compile_context>
chip_gen: v5e
topology: v5e:2x2
jax: 0.10.0
libtpu: 0.0.40
codegen_flags: <defaults>
</compile_context>

<pallas_src>
import jax
import jax.numpy as jnp
from jax.experimental import pallas as pl
from jax.experimental.pallas import tpu as pltpu

IN_FEATURES = 3
OUT_FEATURES = 1
LANES = 128          # vreg lane width: batch maps onto this (fast) axis
SUBLANES = 8         # f32 sublane granularity
TILE_ROWS = 2048     # 128-lane rows per grid step:
                     #   input block  (3, 2048, 128) f32 = 3 MiB
                     #   output block (2048, 128)    f32 = 1 MiB
                     #   ~8 MiB double-buffered -> fits all of v5e/v6e/v7x.
MIN_SPLIT_ROWS = 1024  # only force >=2 grid steps (for v7x's 2nd TC) when each
                       # half still moves a meaningful amount of data


def _round_up(n, m):
    return ((n + m - 1) // m) * m


def linear_kernel(wb_ref, xt_ref, o_ref):
    """Linear(3 -> 1) on a sublane+lane-dense batch slab (VPU-only).

    wb_ref: SMEM (4,) f32 scalar-prefetch  = [w0, w1, w2, bias]
    xt_ref: VMEM (3, tile_rows, 128) f32   -- batch on sublane+lane axes
    o_ref : VMEM (tile_rows, 128) f32
    """
    x0 = xt_ref[0]          # (tile_rows, 128), fully dense vregs
    x1 = xt_ref[1]
    x2 = xt_ref[2]
    o_ref[...] = (x0 * wb_ref[0]
                  + x1 * wb_ref[1]
                  + x2 * wb_ref[2]
                  + wb_ref[3]).astype(o_ref.dtype)


def linear_forward(x, w, b, *, tile_rows=TILE_ROWS):
    """x: (B, 3) f32, w: (1, 3) f32, b: (1,) f32 -> (B, 1) f32."""
    B = x.shape[0]

    # Number of 128-lane batch rows needed.
    rows_needed = pl.cdiv(B, LANES)

    # Clamp the tile for small batches (keep sublane-aligned).
    tile_rows = min(tile_rows, _round_up(rows_needed, SUBLANES))
    # v7x has 2 TensorCores sharing HBM: when there is enough work, keep the
    # "parallel" grid axis at >= 2 steps so both cores stream.
    if rows_needed >= MIN_SPLIT_ROWS:
        tile_rows = min(tile_rows, _round_up(pl.cdiv(rows_needed, 2), SUBLANES))

    n_tiles = pl.cdiv(rows_needed, tile_rows)
    rows = n_tiles * tile_rows
    b_pad = rows * LANES

    # Sublane+lane-dense relayout: batch index b -> (row b // 128, lane b % 128).
    # TODO(synk): in production accept x already feature-major to avoid this
    # extra HBM transpose/pad pass (it roughly doubles end-to-end HBM traffic).
    xt = jnp.zeros((IN_FEATURES, b_pad), x.dtype).at[:, :B].set(x.T)
    xt = xt.reshape(IN_FEATURES, rows, LANES)

    # 3 weights + bias, scalar-prefetched into SMEM once before the grid runs.
    wb = jnp.concatenate([w.reshape(-1), b.reshape(-1)]).astype(jnp.float32)

    out = pl.pallas_call(
        linear_kernel,
        out_shape=jax.ShapeDtypeStruct((rows, LANES), x.dtype),
        grid_spec=pltpu.PrefetchScalarGridSpec(
            num_scalar_prefetch=1,
            grid=(n_tiles,),
            in_specs=[
                pl.BlockSpec((IN_FEATURES, tile_rows, LANES),
                             lambda i, wb_ref: (0, i, 0)),
            ],
            out_specs=pl.BlockSpec((tile_rows, LANES),
                                   lambda i, wb_ref: (i, 0)),
        ),
        compiler_params=pltpu.CompilerParams(
            dimension_semantics=("parallel",),
        ),
    )(wb, xt)

    # Back to the PyTorch (B, 1) layout; drop batch padding (padded lanes hold
    # bias-valued garbage and are sliced off here).
    return out.reshape(b_pad)[:B].reshape(B, OUT_FEATURES)


if __name__ == "__main__":
    key = jax.random.PRNGKey(0)
    kx, kw, kb = jax.random.split(key, 3)

    # Deterministic parameter init (shapes from nn.Linear(3, 1)).
    bound = 1.0 / (IN_FEATURES ** 0.5)
    w = jax.random.uniform(kw, (OUT_FEATURES, IN_FEATURES),
                           minval=-bound, maxval=bound, dtype=jnp.float32)
    b = jax.random.uniform(kb, (OUT_FEATURES,),
                           minval=-bound, maxval=bound, dtype=jnp.float32)

    # Small batched input consistent with the module's (B, 3) forward.
    B = 2
    x = jax.random.normal(kx, (B, IN_FEATURES), dtype=jnp.float32)
    out = linear_forward(x, w, b)
    jax.block_until_ready(out)
    ref = x @ w.T + b
    assert out.shape == (B, OUT_FEATURES)
    assert jnp.allclose(out, ref, atol=1e-5, rtol=1e-5)

    # Batch-1 case exactly as in the original PyTorch spec.
    x1 = jax.random.normal(kx, (1, IN_FEATURES), dtype=jnp.float32)
    out1 = linear_forward(x1, w, b)
    jax.block_until_ready(out1)
    assert jnp.allclose(out1, x1 @ w.T + b, atol=1e-5, rtol=1e-5)

    # A batch spanning multiple 128-lane rows (exercises sublane packing +
    # pad-then-slice discipline).
    x3 = jax.random.normal(kx, (300, IN_FEATURES), dtype=jnp.float32)
    out3 = linear_forward(x3, w, b)
    jax.block_until_ready(out3)
    assert out3.shape == (300, OUT_FEATURES)
    assert jnp.allclose(out3, x3 @ w.T + b, atol=1e-5, rtol=1e-5)

    print("KERNEL_OK")
</pallas_src>

<mosaic_0001>
module attributes {stable_mosaic.version = 11 : i64} {
  func.func @linear_kernel(%arg0: i32, %arg1: memref<4xf32, #tpu.memory_space<smem>>, %arg2: memref<3x8x128xf32, #tpu.memory_space<vmem>>, %arg3: memref<8x128xf32, #tpu.memory_space<vmem>>) attributes {dimension_semantics = [#tpu.dimension_semantics<parallel>], iteration_bounds = array<i64: 1>, scalar_prefetch = 1 : i64, scratch_operands = 0 : i64, tpu.core_type = #tpu.core_type<tc>, window_params = [{transform_indices = @transform_0, window_bounds = array<i64: 3, 8, 128>}, {transform_indices = @transform_1, window_bounds = array<i64: 8, 128>}]} {
    %c0 = arith.constant 0 : index
    %c0_0 = arith.constant 0 : index
    %c0_1 = arith.constant 0 : index
    %0 = vector.load %arg2[%c0, %c0_0, %c0_1] : memref<3x8x128xf32, #tpu.memory_space<vmem>>, vector<1x8x128xf32>
    %1 = vector.shape_cast %0 : vector<1x8x128xf32> to vector<8x128xf32>
    %c1 = arith.constant 1 : index
    %c0_2 = arith.constant 0 : index
    %c0_3 = arith.constant 0 : index
    %2 = vector.load %arg2[%c1, %c0_2, %c0_3] : memref<3x8x128xf32, #tpu.memory_space<vmem>>, vector<1x8x128xf32>
    %3 = vector.shape_cast %2 : vector<1x8x128xf32> to vector<8x128xf32>
    %c2 = arith.constant 2 : index
    %c0_4 = arith.constant 0 : index
    %c0_5 = arith.constant 0 : index
    %4 = vector.load %arg2[%c2, %c0_4, %c0_5] : memref<3x8x128xf32, #tpu.memory_space<vmem>>, vector<1x8x128xf32>
    %5 = vector.shape_cast %4 : vector<1x8x128xf32> to vector<8x128xf32>
    %c0_6 = arith.constant 0 : index
    %6 = memref.load %arg1[%c0_6] : memref<4xf32, #tpu.memory_space<smem>>
    %7 = vector.broadcast %6 : f32 to vector<8x128xf32>
    %8 = arith.mulf %1, %7 : vector<8x128xf32>
    %c1_7 = arith.constant 1 : index
    %9 = memref.load %arg1[%c1_7] : memref<4xf32, #tpu.memory_space<smem>>
    %10 = vector.broadcast %9 : f32 to vector<8x128xf32>
    %11 = arith.mulf %3, %10 : vector<8x128xf32>
    %12 = arith.addf %8, %11 : vector<8x128xf32>
    %c2_8 = arith.constant 2 : index
    %13 = memref.load %arg1[%c2_8] : memref<4xf32, #tpu.memory_space<smem>>
    %14 = vector.broadcast %13 : f32 to vector<8x128xf32>
    %15 = arith.mulf %5, %14 : vector<8x128xf32>
    %16 = arith.addf %12, %15 : vector<8x128xf32>
    %c3 = arith.constant 3 : index
    %17 = memref.load %arg1[%c3] : memref<4xf32, #tpu.memory_space<smem>>
    %18 = vector.broadcast %17 : f32 to vector<8x128xf32>
    %19 = arith.addf %16, %18 : vector<8x128xf32>
    %c0_9 = arith.constant 0 : index
    %c0_10 = arith.constant 0 : index
    %20 = vector.load %arg3[%c0_9, %c0_10] : memref<8x128xf32, #tpu.memory_space<vmem>>, vector<8x128xf32>
    tpu.vector_store %arg3[%c0_9, %c0_10], %19 {strides = array<i32>} : memref<8x128xf32, #tpu.memory_space<vmem>>, vector<8x128xf32>,
    return
  }
  func.func @transform_0(%arg0: i32, %arg1: memref<4xf32, #tpu.memory_space<smem>>) -> (i32, i32, i32) {
    %c0_i32 = arith.constant 0 : i32
    %c0_i32_0 = arith.constant 0 : i32
    %c0_i32_1 = arith.constant 0 : i32
    return %c0_i32, %arg0, %c0_i32_0 : i32, i32, i32
  }
  func.func @transform_1(%arg0: i32, %arg1: memref<4xf32, #tpu.memory_space<smem>>) -> (i32, i32) {
    %c0_i32 = arith.constant 0 : i32
    %c0_i32_0 = arith.constant 0 : i32
    return %arg0, %c0_i32 : i32, i32
  }
}

</mosaic_0001>

<llo_original>
// kernel: tpu_custom_call.1
$region0: #{tpu_custom_call.1}
  #allocation0 [shape = 'u32[]', space=smem, size = 0x4, offset = 0x4, fixed_abs, tag = 'smem constant byte address 0x4 - core index']
  #allocation1 [shape = 'u32[72,128]{1,0:T(1,128)}', space=vmem, size = 0x9000, scoped, tag = 'internal scratch']
  #allocation2 [shape = 's32[1]{0}', space=sflag, size = 0x4, scoped, tag = 'scoped memory for tpu_custom_call.1']
  #allocation3 [shape = 'u8[512]{0}', space=smem, size = 0x200, scoped, tag = 'prefetched SMEM operand 0']
  %s0 = inlined_call_operand.hbm [shape: f32[4], index: 0, kind: input, shape index: {}]
  %s1 = inlined_call_operand.hbm [shape: f32[3,8,128], index: 1, kind: input, shape index: {}]
  %s2 = inlined_call_operand.hbm [shape: f32[8,128], index: 2, kind: output, shape index: {}]
  %s3 = sld [smem:[#allocation0]]
  $region18: #{tpu_custom_call.1} parent=0
    _
  %s5 = ssub.s32 1, %s3
  %s6 = scalar_select 0, %s5, %s3
  %s8 = sshll.u32 %s0, 4
  %s9 = int_to_ptr.hbm [resolvable:$true] %s8
  %11 = dma.hbm_to_smem %s9, 16, [#allocation3], [#allocation2]
  %13 = dma.done [#allocation2], 16
  %14 = sfence
  $region1: #{tpu_custom_call.1} parent=0
    #allocation4 [shape = 'u8[12288]{0}', space=vmem, size = 0x3000, scoped, tag = 'input window, operand 1, single buffered']
    #allocation5 [shape = 's32[1]{0}', space=sflag, size = 0x4, scoped, tag = 'scoped memory for tpu_custom_call.1']
    #allocation6 [shape = 's32[1]{0}', space=sflag, size = 0x4, scoped, tag = 'scoped memory for tpu_custom_call.1']
    #allocation7 [shape = 'u8[4096]{0}', space=vmem, size = 0x1000, scoped, tag = 'output window, operand 0, single buffered']
    %15 = vsyncpa [#allocation5], 0
    %16 = vsyncpa [#allocation6], 0
    // Predicated region
    $region2: #{tpu_custom_call.1} parent=1 // pred_check
      _
    $region3: #{tpu_custom_call.1} parent=1 // pred_check_branch
      %18 = sbr.rel (0) target = $region5
    $region4: #{tpu_custom_call.1} parent=1 // pred_region
      %20 = vsyncadd [#allocation5], 0
      %s21 = sshll.u32 %s1, 4
      %s22 = int_to_ptr.hbm [resolvable:$true] %s21
      %s23 = sshll.u32 [#allocation4], 4
      %s24 = int_to_ptr.vmem [resolvable:$true] %s23
      %29 = dma.hbm_to_vmem [thread:$0]  %s22, 384, %s24, [#allocation5], 128, 128, 8
    $region5: #{tpu_custom_call.1} parent=1 // pred_fallthru
      _
    // Predicated region
    $region6: #{tpu_custom_call.1} parent=1 // pred_check
      _
    $region7: #{tpu_custom_call.1} parent=1 // pred_check_branch
      %31 = sbr.rel (0) target = $region9
    $region8: #{tpu_custom_call.1} parent=1 // pred_region
      %33 = dma.done [#allocation5], 384
    $region9: #{tpu_custom_call.1} parent=1 // pred_fallthru
      _
    %v34 = vld [vmem:[#allocation4] sm:$0xff]
    %s35 = scalar_lea.vmem [#allocation4], 8
    %v36 = vld [vmem:[%s35] sm:$0xff]
    %s37 = scalar_lea.vmem [#allocation4], 16
    %v38 = vld [vmem:[%s37] sm:$0xff]
    %s39 = sld [smem:[#allocation3]]
    %v40 = vstv %s39
    %v41 = vmul.f32 %v34, %v40
    %s42 = sld [smem:[#allocation3 + $0x1]]
    %v43 = vstv %s42
    %v44 = vmul.f32 %v36, %v43
    %v45 = vadd.f32 %v41, %v44
    %s46 = sld [smem:[#allocation3 + $0x2]]
    %v47 = vstv %s46
    %v48 = vmul.f32 %v38, %v47
    %v49 = vadd.f32 %v45, %v48
    %s50 = sld [smem:[#allocation3 + $0x3]]
    %v51 = vstv %s50
    %v52 = vadd.f32 %v49, %v51
    %53 = vst [vmem:[#allocation7] sm:$0xff] %v52
    // Predicated region
    $region10: #{tpu_custom_call.1} parent=1 // pred_check
      _
    $region11: #{tpu_custom_call.1} parent=1 // pred_check_branch
      %55 = sbr.rel (0) target = $region13
    $region12: #{tpu_custom_call.1} parent=1 // pred_region
      %57 = vsyncadd [#allocation6], 0
      %s59 = sshll.u32 [#allocation7], 4
      %s60 = int_to_ptr.vmem [resolvable:$true] %s59
      %s61 = sshll.u32 %s2, 4
      %s62 = int_to_ptr.hbm [resolvable:$true] %s61
      %64 = dma.vmem_to_hbm [thread:$0]  %s60, 128, %s62, [#allocation6]
    $region13: #{tpu_custom_call.1} parent=1 // pred_fallthru
      _
    // Predicated region
    $region14: #{tpu_custom_call.1} parent=1 // pred_check
      _
    $region15: #{tpu_custom_call.1} parent=1 // pred_check_branch
      %66 = sbr.rel (0) target = $region17
    $region16: #{tpu_custom_call.1} parent=1 // pred_region
      %68 = dma.done [#allocation6], 128
    $region17: #{tpu_custom_call.1} parent=1 // pred_fallthru
      _
    %69 = vsyncpa [#allocation5], 1
    %70 = vsyncpa [#allocation6], 1

</llo_original>
